<compile_context>
chip_gen: v7x
topology: tpu7x:2x2x1
jax: 0.10.0
libtpu: 0.0.40
codegen_flags: <defaults>
</compile_context>

<pallas_src>
import math
import functools

import jax
import jax.numpy as jnp
from jax import lax
from jax.experimental import pallas as pl
from jax.experimental.pallas import tpu as pltpu


def _synthesis_kernel(dcoef_ref, x_ref, w_ref, noise_ref, bias_ref, o_ref, *,
                      offsets, M, MC, activate):
    """One (batch, row-tile, cout-tile) grid step.

    dcoef_ref : (1, 1, TC)              f32  per-batch demod coeffs * act_gain
    x_ref     : (1, 1, Rf, K)           bf16 style-modulated flattened padded row tile
    w_ref     : (n_ct*n_taps, K, TC)    bf16 raw conv weight (grid-invariant, whole)
    noise_ref : (1, M, 1)               f32  noise*strength*act_gain per acc row
    bias_ref  : (1, TC)                 f32  bias * act_gain
    o_ref     : (1, 1, M, TC)           out_dtype
    """
    n_taps = len(offsets)
    ct = pl.program_id(2)                        # which Cout tile of the weight
    dc = dcoef_ref[0]                            # (1, TC)
    bias = bias_ref[...]                         # (1, TC)

    start = 0
    while start < M:                             # static chunk loop
        mc = min(MC, M - start)
        # taps accumulate back-to-back into a small f32 accumulator; init from
        # tap 0 (no zeros pass).  Weight tiles are read at a dynamic leading
        # index (ct*n_taps + t) of the VMEM-resident weight.
        acc = jnp.dot(x_ref[0, 0, pl.ds(offsets[0] + start, mc), :],
                      w_ref[ct * n_taps + 0],
                      preferred_element_type=jnp.float32)
        for t in range(1, n_taps):
            acc = acc + jnp.dot(x_ref[0, 0, pl.ds(offsets[t] + start, mc), :],
                                w_ref[ct * n_taps + t],
                                preferred_element_type=jnp.float32)
        # epilogue: demodulate*gain + noise + bias (+ leaky relu); gain is
        # pre-folded into dcoef / noise / bias in the wrapper.
        out = acc * dc + noise_ref[0, pl.ds(start, mc), :] + bias
        if activate:
            out = jnp.where(out >= 0, out, 0.2 * out)
        o_ref[0, 0, pl.ds(start, mc), :] = out.astype(o_ref.dtype)
        start += mc


def _pick_tile_cout(cout):
    """128 on v5e/older (128-wide MXU), 256 on v6e/v7x (256-wide MXU)."""
    if cout <= 128:
        return 128
    kind = ""
    try:
        kind = jax.devices()[0].device_kind.lower()
    except (RuntimeError, IndexError):
        pass
    if ("v6" in kind) or ("v7" in kind) or ("7x" in kind):
        return 256
    return 128


def synthesis_layer_forward(x_nchw, w_latent, params, *, gain=1.0,
                            activate=True, use_noise=True,
                            tile_rows=None, tile_cout=None, kw_pack=None,
                            out_dtype=jnp.float32):
    """Forward of SynthesisLayer(up=False, kernel_size=3), noise_mode='const'."""
    aw = params["affine_weight"]            # [Cin, w_dim]
    ab = params["affine_bias"]              # [Cin]   (init to ones)
    wt = params["weight"]                   # [Cout, Cin, KH, KW]
    bias = params["bias"]                   # [Cout]
    noise_const = params["noise_const"]     # [H, W]
    noise_strength = params["noise_strength"]

    B, Cin, H, W = x_nchw.shape
    Cout, _, KH, KW = wt.shape
    w_dim = aw.shape[1]
    assert KH == 3 and KW == 3, "only kernel_size=3 implemented"
    # TODO(synk): up=True (stride-2 conv_transpose + bilinear resample_filter)
    #             and noise_mode='random' (fresh randn per call) not implemented.

    f32 = jnp.float32
    out_bytes = jnp.dtype(out_dtype).itemsize
    act_gain = (math.sqrt(2.0) if activate else 1.0) * float(gain)

    # ---- tiling parameters ---------------------------------------------------
    TC = int(tile_cout) if tile_cout is not None else _pick_tile_cout(Cout)
    assert TC % 128 == 0
    Cout_p = ((Cout + TC - 1) // TC) * TC      # lane-dense stores, full MXU N
    n_ct = Cout_p // TC
    pad_c = Cout_p - Cout
    Wp = W + 2                                 # padded row width (left/right halo)
    if tile_rows is None:
        # ~4 MB output tile target; amortizes per-step overhead, fits 64 MiB
        # v7x VMEM with double buffering given the limit below.
        tile_rows = max(1, (4 * 1024 * 1024) // (Wp * TC * out_bytes))
    TH = max(1, min(H, int(tile_rows)))
    n_ht = -(-H // TH)                         # ceil-div grid; pad H (no TH=1 collapse)
    Hp = n_ht * TH
    M = TH * Wp                                # acc rows per tile (incl. junk cols)
    Rf = (TH + 3) * Wp                         # flat rows: row halo + 1 spare row

    if kw_pack is None:
        kw_pack = Cin < 128                    # width im2col only while K stays small
    if kw_pack:
        K, n_taps = 3 * Cin, 3
        offsets = tuple(kh * Wp for kh in range(KH))
    else:
        K, n_taps = Cin, 9
        offsets = tuple(kh * Wp + kw for kh in range(KH) for kw in range(KW))
    # TODO(synk): pad Wp to a multiple of 16 + pltpu.roll for the kw shifts if
    #             the bundle dump shows per-tap relayout copies.

    # accumulator chunk: ~128 KiB of f32 per chunk stays close to the vreg file
    rows_per_chunk = max(1, ((128 * 1024) // (TC * 4)) // Wp)
    MC = int(min(M, rows_per_chunk * Wp))

    # ---- hoisted plain-JAX preprocessing (one batched matmul each) -----------
    styles = (w_latent.astype(f32) @ (aw.astype(f32) * (1.0 / math.sqrt(w_dim))).T
              + ab.astype(f32))                                        # (B, Cin)
    wsq = jnp.sum(wt.astype(f32) ** 2, axis=(2, 3)).T                  # (Cin, Cout)
    dcoefs = lax.rsqrt(jnp.dot(styles * styles, wsq) + 1e-8)           # (B, Cout)

    # act_gain folded into the epilogue operands (one fewer VPU pass per chunk)
    dcoefs_k = jnp.pad(dcoefs * act_gain, ((0, 0), (0, pad_c))).reshape(B, 1, Cout_p)
    bias_k = (jnp.pad(bias.astype(f32), ((0, pad_c),)) * act_gain).reshape(1, Cout_p)

    # raw, batch-invariant conv weight -> (n_ct*n_taps, K, TC) bf16
    w_t = jnp.transpose(wt.astype(f32), (2, 3, 1, 0))                  # (KH, KW, Cin, Cout)
    w_r = (w_t.reshape(KH, KW * Cin, Cout) if kw_pack
           else w_t.reshape(KH * KW, Cin, Cout))                       # (n_taps, K, Cout)
    w_k = (jnp.pad(w_r, ((0, 0), (0, 0), (0, pad_c)))
           .reshape(n_taps, K, n_ct, TC)
           .transpose(2, 0, 1, 3)
           .reshape(n_ct * n_taps, K, TC)
           .astype(jnp.bfloat16))

    # input: NCHW -> NHWC, *style modulation folded into this pass*, pad rows
    # (1, 2 + Hp-H) / cols, optional kw interleave, overlapping row tiles, bf16.
    x_mod = jnp.transpose(x_nchw, (0, 2, 3, 1)).astype(f32) * styles[:, None, None, :]
    pad_hi = 2 + (Hp - H)
    if kw_pack:
        xp = jnp.pad(x_mod, ((0, 0), (1, pad_hi), (1, 3), (0, 0)))     # Wp+2 cols
        x_src = jnp.concatenate([xp[:, :, j:j + Wp, :] for j in range(KW)], axis=-1)
    else:
        x_src = jnp.pad(x_mod, ((0, 0), (1, pad_hi), (1, 1), (0, 0)))  # Wp cols
    row_ids = jnp.arange(n_ht)[:, None] * TH + jnp.arange(TH + 3)[None, :]
    x_tiles = x_src[:, row_ids].reshape(B, n_ht, Rf, K).astype(jnp.bfloat16)
    # TODO(synk): the NCHW<->NHWC transposes and the materialized halo gather are
    #             extra HBM passes; keeping NHWC across layers and/or a manual
    #             pl.ANY + make_async_copy halo DMA would remove them.

    # noise: (H, W) -> per-row-tile (M, 1); lane-broadcast over Cout in-kernel.
    ns = jnp.asarray(noise_strength, dtype=f32)
    noise2d = (noise_const.astype(f32) * ns) if use_noise else jnp.zeros((H, W), f32)
    noise_tiles = (jnp.pad(noise2d, ((0, Hp - H), (0, 2))) * act_gain
                   ).reshape(n_ht, M, 1)

    kernel = functools.partial(_synthesis_kernel, offsets=offsets, M=M, MC=MC,
                               activate=activate)

    # VMEM budget: x tiles (2x), out tiles (2x), whole weight (1-2x), epilogue
    # operands + accumulator temporaries.
    w_bytes = int(w_k.size) * 2
    vmem_est = (2 * Rf * K * 2 + 2 * M * TC * out_bytes + 2 * w_bytes
                + 2 * M * 4 + 8 * TC * 4 + 2 * MC * TC * 4 + (2 << 20))
    vmem_limit = int(min(96 << 20, max(32 << 20, vmem_est)))

    # grid-invariant weight -> constant index_map; single-buffer it only when it
    # is big enough for the extra buffer to matter (keeps the small-shape path
    # free of version-dependent pipeline_mode behavior).
    use_sbw = hasattr(pl, "Buffered") and w_bytes > (2 << 20)

    def _call(single_buffer_weight):
        w_kwargs = (dict(pipeline_mode=pl.Buffered(1))
                    if single_buffer_weight else {})
        return pl.pallas_call(
            kernel,
            out_shape=jax.ShapeDtypeStruct((B, n_ht, M, Cout_p), out_dtype),
            grid_spec=pltpu.PrefetchScalarGridSpec(
                num_scalar_prefetch=0,
                grid=(B, n_ht, n_ct),
                in_specs=[
                    pl.BlockSpec((1, 1, TC), lambda b, h, c: (b, 0, c)),         # dcoefs*g
                    pl.BlockSpec((1, 1, Rf, K), lambda b, h, c: (b, h, 0, 0)),   # x row tile
                    pl.BlockSpec((n_ct * n_taps, K, TC),                         # conv weight
                                 lambda b, h, c: (0, 0, 0), **w_kwargs),
                    pl.BlockSpec((1, M, 1), lambda b, h, c: (h, 0, 0)),          # noise*g
                    pl.BlockSpec((1, TC), lambda b, h, c: (0, c)),               # bias*g
                ],
                out_specs=pl.BlockSpec((1, 1, M, TC),
                                       lambda b, h, c: (b, h, 0, c)),            # <-- 4 idxs
            ),
            compiler_params=pltpu.CompilerParams(
                dimension_semantics=("parallel", "parallel", "parallel"),
                vmem_limit_bytes=vmem_limit),
        )(dcoefs_k, x_tiles, w_k, noise_tiles, bias_k)

    _LoweringErr = getattr(pltpu, "LoweringException", NotImplementedError)
    try:
        out_t = _call(use_sbw)
    except (TypeError, ValueError, NotImplementedError, _LoweringErr):
        if not use_sbw:
            raise                     # genuine error: do not mask it
        out_t = _call(False)          # pl.Buffered(1) unsupported -> double buffer

    # drop junk columns / padded rows / padded Cout channels, back to NCHW
    out = out_t.reshape(B, n_ht, TH, Wp, Cout_p)[:, :, :, :W, :Cout]
    out = out.reshape(B, Hp, W, Cout)[:, :H]
    return out.transpose(0, 3, 1, 2)


def reference_forward(x_nchw, w_latent, params, *, gain=1.0,
                      activate=True, use_noise=True):
    """Pure-JAX re-implementation of the PyTorch forward (NCHW), for checking."""
    aw = params["affine_weight"]
    ab = params["affine_bias"]
    wt = params["weight"]
    bias = params["bias"]
    noise_const = params["noise_const"]
    noise_strength = params["noise_strength"]
    B, Cin, H, W = x_nchw.shape
    w_dim = aw.shape[1]

    styles = w_latent @ (aw * (1.0 / math.sqrt(w_dim))).T + ab                # [B, Cin]
    wmod = wt[None] * styles[:, None, :, None, None]
    dcoefs = lax.rsqrt(jnp.sum(wmod * wmod, axis=(2, 3, 4)) + 1e-8)           # [B, Cout]
    xm = x_nchw * styles[:, :, None, None]
    y = lax.conv_general_dilated(xm, wt, window_strides=(1, 1),
                                 padding=((1, 1), (1, 1)),
                                 dimension_numbers=("NCHW", "OIHW", "NCHW"))
    noise2d = (noise_const * noise_strength) if use_noise else jnp.zeros((H, W), jnp.float32)
    y = noise2d[None, None] + y * dcoefs[:, :, None, None]
    y = y + bias[None, :, None, None]
    act_gain = (math.sqrt(2.0) if activate else 1.0) * gain
    if act_gain != 1.0:
        y = y * act_gain
    if activate:
        y = jnp.where(y >= 0, y, 0.2 * y)
    return y


if __name__ == "__main__":
    B, Cin, Cout, w_dim, res, ksize = 2, 4, 8, 32, 16, 3

    key = jax.random.PRNGKey(0)
    k = jax.random.split(key, 6)
    params = {
        "affine_weight": jax.random.normal(k[0], (Cin, w_dim), jnp.float32),  # randn / lr_mult(1)
        "affine_bias": jnp.ones((Cin,), jnp.float32),                         # init_bias_one=True
        "weight": jax.random.normal(k[1], (Cout, Cin, ksize, ksize), jnp.float32),
        "bias": jnp.zeros((Cout,), jnp.float32),
        "noise_const": jax.random.normal(k[2], (res, res), jnp.float32),
        # __init__ sets noise_strength = 0; use a nonzero value so the const-noise
        # (addcmul) path is actually exercised.
        "noise_strength": jnp.float32(0.1),
    }
    x = jax.random.normal(k[3], (B, Cin, res, res), jnp.float32)              # NCHW like PyTorch
    w = jax.random.normal(k[4], (B, w_dim), jnp.float32)

    ref = reference_forward(x, w, params, gain=1.0)

    # 1) kw-packed taps (Cin<128), explicit 8-row spatial tiles, f32 output
    out = jax.block_until_ready(
        synthesis_layer_forward(x, w, params, gain=1.0, tile_rows=8))
    assert out.shape == (B, Cout, res, res)
    assert bool(jnp.all(jnp.isfinite(out)))
    err = float(jnp.max(jnp.abs(out - ref)))
    assert err < 1e-1, f"max abs err {err}"   # bf16 MXU inputs, f32 accumulation

    # 2) 9-tap path + ragged row tiling (H padded up to a multiple of TH)
    out2 = jax.block_until_ready(
        synthesis_layer_forward(x, w, params, gain=1.0, kw_pack=False, tile_rows=5))
    err2 = float(jnp.max(jnp.abs(out2 - ref)))
    assert err2 < 1e-1, f"max abs err {err2}"

    # 3) default heuristic tiling, bf16 kernel output
    out3 = jax.block_until_ready(
        synthesis_layer_forward(x, w, params, gain=1.0, out_dtype=jnp.bfloat16))
    err3 = float(jnp.max(jnp.abs(out3.astype(jnp.float32) - ref)))
    assert err3 < 1e-1, f"max abs err {err3}"

    print("KERNEL_OK")
</pallas_src>

<mosaic_0001>
module attributes {stable_mosaic.version = 11 : i64} {
  func.func @_synthesis_kernel(%arg0: i32, %arg1: i32, %arg2: i32, %arg3: memref<1x1x128xf32, #tpu.memory_space<vmem>>, %arg4: memref<1x1x198x12xbf16, #tpu.memory_space<vmem>>, %arg5: memref<3x12x128xbf16, #tpu.memory_space<vmem>>, %arg6: memref<1x144x1xf32, #tpu.memory_space<vmem>>, %arg7: memref<1x128xf32, #tpu.memory_space<vmem>>, %arg8: memref<1x1x144x128xf32, #tpu.memory_space<vmem>>) attributes {dimension_semantics = [#tpu.dimension_semantics<parallel>, #tpu.dimension_semantics<parallel>, #tpu.dimension_semantics<parallel>], iteration_bounds = array<i64: 2, 2, 1>, scalar_prefetch = 0 : i64, scratch_operands = 0 : i64, tpu.core_type = #tpu.core_type<tc>, window_params = [{transform_indices = @transform_0, window_bounds = array<i64: 1, 1, 128>}, {transform_indices = @transform_1, window_bounds = array<i64: 1, 1, 198, 12>}, {pipeline_mode = #tpu.pipeline_mode<synchronous>, transform_indices = @transform_2, window_bounds = array<i64: 3, 12, 128>}, {transform_indices = @transform_3, window_bounds = array<i64: 1, 144, 1>}, {transform_indices = @transform_4, window_bounds = array<i64: 1, 128>}, {transform_indices = @transform_5, window_bounds = array<i64: 1, 1, 144, 128>}]} {
    %c0 = arith.constant 0 : index
    %c0_0 = arith.constant 0 : index
    %c0_1 = arith.constant 0 : index
    %0 = vector.load %arg3[%c0, %c0_0, %c0_1] : memref<1x1x128xf32, #tpu.memory_space<vmem>>, vector<1x1x128xf32>
    %1 = vector.shape_cast %0 : vector<1x1x128xf32> to vector<1x128xf32>
    %c0_2 = arith.constant 0 : index
    %c0_3 = arith.constant 0 : index
    %2 = vector.load %arg7[%c0_2, %c0_3] : memref<1x128xf32, #tpu.memory_space<vmem>>, vector<1x128xf32>
    %c0_4 = arith.constant 0 : index
    %c0_5 = arith.constant 0 : index
    %c0_6 = arith.constant 0 : index
    %c0_7 = arith.constant 0 : index
    %3 = vector.load %arg4[%c0_4, %c0_5, %c0_6, %c0_7] : memref<1x1x198x12xbf16, #tpu.memory_space<vmem>>, vector<1x1x144x12xbf16>
    %4 = vector.shape_cast %3 : vector<1x1x144x12xbf16> to vector<144x12xbf16>
    %c3_i32 = arith.constant 3 : i32
    %5 = arith.muli %arg2, %c3_i32 : i32
    %c0_i32 = arith.constant 0 : i32
    %6 = arith.addi %5, %c0_i32 : i32
    %7 = arith.index_cast %6 : i32 to index
    %c0_8 = arith.constant 0 : index
    %c0_9 = arith.constant 0 : index
    %8 = vector.load %arg5[%7, %c0_8, %c0_9] : memref<3x12x128xbf16, #tpu.memory_space<vmem>>, vector<1x12x128xbf16>
    %9 = vector.shape_cast %8 : vector<1x12x128xbf16> to vector<12x128xbf16>
    %cst = arith.constant dense<0.000000e+00> : vector<144x128xf32>
    %10 = tpu.matmul %4, %9, %cst {dimension_numbers = #tpu.dot_dimension_numbers<[1], [0], [0], [1], [0, 0, 1, 1], [], []>} : vector<144x12xbf16>, vector<12x128xbf16>, vector<144x128xf32> -> vector<144x128xf32>
    %c0_10 = arith.constant 0 : index
    %c0_11 = arith.constant 0 : index
    %c18 = arith.constant 18 : index
    %c0_12 = arith.constant 0 : index
    %11 = vector.load %arg4[%c0_10, %c0_11, %c18, %c0_12] : memref<1x1x198x12xbf16, #tpu.memory_space<vmem>>, vector<1x1x144x12xbf16>
    %12 = vector.shape_cast %11 : vector<1x1x144x12xbf16> to vector<144x12xbf16>
    %c3_i32_13 = arith.constant 3 : i32
    %13 = arith.muli %arg2, %c3_i32_13 : i32
    %c1_i32 = arith.constant 1 : i32
    %14 = arith.addi %13, %c1_i32 : i32
    %15 = arith.index_cast %14 : i32 to index
    %c0_14 = arith.constant 0 : index
    %c0_15 = arith.constant 0 : index
    %16 = vector.load %arg5[%15, %c0_14, %c0_15] : memref<3x12x128xbf16, #tpu.memory_space<vmem>>, vector<1x12x128xbf16>
    %17 = vector.shape_cast %16 : vector<1x12x128xbf16> to vector<12x128xbf16>
    %cst_16 = arith.constant dense<0.000000e+00> : vector<144x128xf32>
    %18 = tpu.matmul %12, %17, %cst_16 {dimension_numbers = #tpu.dot_dimension_numbers<[1], [0], [0], [1], [0, 0, 1, 1], [], []>} : vector<144x12xbf16>, vector<12x128xbf16>, vector<144x128xf32> -> vector<144x128xf32>
    %19 = arith.addf %10, %18 : vector<144x128xf32>
    %c0_17 = arith.constant 0 : index
    %c0_18 = arith.constant 0 : index
    %c36 = arith.constant 36 : index
    %c0_19 = arith.constant 0 : index
    %20 = vector.load %arg4[%c0_17, %c0_18, %c36, %c0_19] : memref<1x1x198x12xbf16, #tpu.memory_space<vmem>>, vector<1x1x144x12xbf16>
    %21 = vector.shape_cast %20 : vector<1x1x144x12xbf16> to vector<144x12xbf16>
    %c3_i32_20 = arith.constant 3 : i32
    %22 = arith.muli %arg2, %c3_i32_20 : i32
    %c2_i32 = arith.constant 2 : i32
    %23 = arith.addi %22, %c2_i32 : i32
    %24 = arith.index_cast %23 : i32 to index
    %c0_21 = arith.constant 0 : index
    %c0_22 = arith.constant 0 : index
    %25 = vector.load %arg5[%24, %c0_21, %c0_22] : memref<3x12x128xbf16, #tpu.memory_space<vmem>>, vector<1x12x128xbf16>
    %26 = vector.shape_cast %25 : vector<1x12x128xbf16> to vector<12x128xbf16>
    %cst_23 = arith.constant dense<0.000000e+00> : vector<144x128xf32>
    %27 = tpu.matmul %21, %26, %cst_23 {dimension_numbers = #tpu.dot_dimension_numbers<[1], [0], [0], [1], [0, 0, 1, 1], [], []>} : vector<144x12xbf16>, vector<12x128xbf16>, vector<144x128xf32> -> vector<144x128xf32>
    %28 = arith.addf %19, %27 : vector<144x128xf32>
    %29 = vector.broadcast %1 : vector<1x128xf32> to vector<144x128xf32>
    %30 = arith.mulf %28, %29 : vector<144x128xf32>
    %c0_24 = arith.constant 0 : index
    %c0_25 = arith.constant 0 : index
    %c0_26 = arith.constant 0 : index
    %31 = vector.load %arg6[%c0_24, %c0_25, %c0_26] : memref<1x144x1xf32, #tpu.memory_space<vmem>>, vector<1x144x1xf32>
    %32 = vector.shape_cast %31 : vector<1x144x1xf32> to vector<144x1xf32>
    %33 = vector.broadcast %32 : vector<144x1xf32> to vector<144x128xf32>
    %34 = arith.addf %30, %33 : vector<144x128xf32>
    %35 = vector.broadcast %2 : vector<1x128xf32> to vector<144x128xf32>
    %36 = arith.addf %34, %35 : vector<144x128xf32>
    %cst_27 = arith.constant 0.000000e+00 : f32
    %37 = vector.broadcast %cst_27 : f32 to vector<144x128xf32>
    %38 = arith.cmpf oge, %36, %37 : vector<144x128xf32>
    %cst_28 = arith.constant 2.000000e-01 : f32
    %39 = vector.broadcast %cst_28 : f32 to vector<144x128xf32>
    %40 = arith.mulf %39, %36 : vector<144x128xf32>
    %41 = arith.select %38, %36, %40 : vector<144x128xi1>, vector<144x128xf32>
    %c0_29 = arith.constant 0 : index
    %c0_30 = arith.constant 0 : index
    %c0_31 = arith.constant 0 : index
    %c0_32 = arith.constant 0 : index
    %42 = vector.load %arg8[%c0_29, %c0_30, %c0_31, %c0_32] : memref<1x1x144x128xf32, #tpu.memory_space<vmem>>, vector<1x1x144x128xf32>
    %43 = vector.shape_cast %42 : vector<1x1x144x128xf32> to vector<144x128xf32>
    %44 = vector.shape_cast %41 : vector<144x128xf32> to vector<1x1x144x128xf32>
    tpu.vector_store %arg8[%c0_29, %c0_30, %c0_31, %c0_32], %44 {strides = array<i32>} : memref<1x1x144x128xf32, #tpu.memory_space<vmem>>, vector<1x1x144x128xf32>,
    return
  }
  func.func @transform_0(%arg0: i32, %arg1: i32, %arg2: i32) -> (i32, i32, i32) {
    %c0_i32 = arith.constant 0 : i32
    %c0_i32_0 = arith.constant 0 : i32
    return %arg0, %c0_i32, %arg2 : i32, i32, i32
  }
  func.func @transform_1(%arg0: i32, %arg1: i32, %arg2: i32) -> (i32, i32, i32, i32) {
    %c0_i32 = arith.constant 0 : i32
    %c0_i32_0 = arith.constant 0 : i32
    %c0_i32_1 = arith.constant 0 : i32
    return %arg0, %arg1, %c0_i32, %c0_i32_0 : i32, i32, i32, i32
  }
  func.func @transform_2(%arg0: i32, %arg1: i32, %arg2: i32) -> (i32, i32, i32) {
    %c0_i32 = arith.constant 0 : i32
    %c0_i32_0 = arith.constant 0 : i32
    %c0_i32_1 = arith.constant 0 : i32
    %c0_i32_2 = arith.constant 0 : i32
    return %c0_i32, %c0_i32_0, %c0_i32_1 : i32, i32, i32
  }
  func.func @transform_3(%arg0: i32, %arg1: i32, %arg2: i32) -> (i32, i32, i32) {
    %c0_i32 = arith.constant 0 : i32
    %c0_i32_0 = arith.constant 0 : i32
    %c0_i32_1 = arith.constant 0 : i32
    return %arg1, %c0_i32, %c0_i32_0 : i32, i32, i32
  }
  func.func @transform_4(%arg0: i32, %arg1: i32, %arg2: i32) -> (i32, i32) {
    %c0_i32 = arith.constant 0 : i32
    %c0_i32_0 = arith.constant 0 : i32
    return %c0_i32, %arg2 : i32, i32
  }
  func.func @transform_5(%arg0: i32, %arg1: i32, %arg2: i32) -> (i32, i32, i32, i32) {
    %c0_i32 = arith.constant 0 : i32
    %c0_i32_0 = arith.constant 0 : i32
    return %arg0, %arg1, %c0_i32, %arg2 : i32, i32, i32, i32
  }
}

</mosaic_0001>

<llo_original>
// kernel: tpu_custom_call.1
$region0: #{tpu_custom_call.1}
  #allocation0 [shape = 'u32[]', space=smem, size = 0x4, offset = 0x4, fixed_abs, tag = 'smem constant byte address 0x4 - core index']
  #allocation1 [shape = 'u32[144,128]{1,0:T(1,128)}', space=vmem, size = 0x12000, scoped, tag = 'internal scratch']
  %s0 = inlined_call_operand.vmem [shape: f32[2,1,128], index: 0, kind: input, shape index: {}]
  %s1 = inlined_call_operand.vmem [shape: bf16[2,2,198,12], index: 1, kind: input, shape index: {}]
  %s2 = inlined_call_operand.vmem [shape: bf16[3,12,128], index: 2, kind: input, shape index: {}]
  %s3 = inlined_call_operand.vmem [shape: f32[2,144,1], index: 3, kind: input, shape index: {}]
  %s4 = inlined_call_operand.vmem [shape: f32[1,128], index: 4, kind: input, shape index: {}]
  %s5 = inlined_call_operand.hbm [shape: f32[2,2,144,128], index: 5, kind: output, shape index: {}]
  %s6 = sld [smem:[#allocation0]]
  $region53: #{tpu_custom_call.1} parent=0
    _
  %s8 = ssub.s32 1, %s6
  %s9 = scalar_select 0, %s8, %s6
  $region1: #{tpu_custom_call.1} parent=0
    #allocation2 [shape = 'u8[147456]{0}', space=vmem, size = 0x24000, scoped, tag = 'output window, operand 0']
    #allocation3 [shape = 's32[2]{0}', space=sflag, size = 0x8, scoped, tag = 'scoped memory for tpu_custom_call.1']
    %10 = vsyncpa [#allocation3], 0
    %s11 = scalar_lea.sflag [#allocation3], 1
    %12 = vsyncpa %s11, 0
    loop: start=0, step=1, limit=6
    $region2: #{tpu_custom_call.1} parent=1 // loop_pre_header
      _
    $region3: #{tpu_custom_call.1} parent=1 // loop_header
      %s14 = sphi 0, %s18
      %p15 = scmp.ge.s32.totalorder %s14, 6
      %s21 = sphi 0, %s40
      %s22 = sphi 0, %s36
      %s23 = sphi 0, %s32
      %s24 = sphi 0, %s21
      %s25 = sphi 0, %s22
      %s26 = sphi 0, %s23
      %s27 = sphi 0, %s24
      %s28 = sphi 0, %s25
      %s29 = sphi 0, %s26
      %s45 = sphi 0, %s47
      %s48 = sphi 0, %s45
      %s49 = sphi 0, %s48
      %s65 = sphi 0, %s49
      %s73 = sphi 0, %s75
      %s76 = sphi 0, %s73
      %s77 = sphi 0, %s76
      %s93 = sphi 0, %s77
      %s97 = sphi 0, %s97
      %s99 = sphi 0, %s97
      %s100 = sphi 0, %s99
      %s114 = sphi 0, %s100
      %s120 = sphi 0, %s122
      %s123 = sphi 0, %s120
      %s124 = sphi 0, %s123
      %s140 = sphi 0, %s124
      %s146 = sphi 0, %s148
      %s149 = sphi 0, %s146
      %s150 = sphi 0, %s149
      %s166 = sphi 0, %s150
      %s176 = sphi 0, %s178
      %s179 = sphi 0, %s176
      %s180 = sphi 0, %s179
      %s196 = sphi 0, %s180
    $region4: #{tpu_custom_call.1} parent=1 // loop_header_branch
      %17 = sbr.rel (%p15) target = $region8
    $region5: #{tpu_custom_call.1} parent=1 // loop_body
      %s19 = ssub.s32 %s14, 1
      %s20 = ssub.s32 %s14, 2
      %s30 = sadd.s32 1, %s23
      %p31 = scmp.ge.s32.totalorder %s30, 1
      %s32 = scalar_select %p31, 0, %s30
      %s33 = sadd.s32 1, %s22
      %s34 = scalar_select %p31, %s33, %s22
      %p35 = scmp.ge.s32.totalorder %s34, 2
      %s36 = scalar_select %p35, 0, %s34
      %s37 = sadd.s32 1, %s21
      %s38 = scalar_select %p35, %s37, %s21
      %p39 = scmp.ge.s32.totalorder %s38, 2
      %s40 = scalar_select %p39, 0, %s38
      %s41 = ssub.s32 %s21, %s40
      %s42 = ssub.s32 %s23, %s32
      %s43 = sor.u32 %s41, %s42
      %p44 = scmp.eq.s32.totalorder %s43, 0
      %s46 = sadd.s32 %s45, 1
      %s47 = scalar_select %p44, %s45, %s46
      %p50 = pneg %p44
      %p51 = scmp.eq.s32.totalorder %s14, 3
      %p52 = por %p50, %p51
      %p53 = scmp.ne.s32.totalorder %s45, %s48
      %p54 = scmp.eq.s32.totalorder %s14, 0
      %p55 = por %p53, %p54
      %p56 = scmp.ne.s32.totalorder %s45, %s48
      %p57 = scmp.eq.s32.totalorder %s19, 3
      %p58 = por %p56, %p57
      %p59 = scmp.ne.s32.totalorder %s48, %s49
      %p60 = scmp.eq.s32.totalorder %s19, 0
      %p61 = por %p59, %p60
      %p62 = scmp.ne.s32.totalorder %s48, %s49
      %p63 = scmp.eq.s32.totalorder %s20, 3
      %p64 = por %p62, %p63
      %p66 = scmp.ne.s32.totalorder %s49, %s65
      %p67 = scmp.eq.s32.totalorder %s20, 0
      %p68 = por %p66, %p67
      %s69 = ssub.s32 %s21, %s40
      %s70 = ssub.s32 %s22, %s36
      %s71 = sor.u32 %s69, %s70
      %p72 = scmp.eq.s32.totalorder %s71, 0
      %s74 = sadd.s32 %s73, 1
      %s75 = scalar_select %p72, %s73, %s74
      %p78 = pneg %p72
      %p79 = scmp.eq.s32.totalorder %s14, 3
      %p80 = por %p78, %p79
      %p81 = scmp.ne.s32.totalorder %s73, %s76
      %p82 = scmp.eq.s32.totalorder %s14, 0
      %p83 = por %p81, %p82
      %p84 = scmp.ne.s32.totalorder %s73, %s76
      %p85 = scmp.eq.s32.totalorder %s19, 3
      %p86 = por %p84, %p85
      %p87 = scmp.ne.s32.totalorder %s76, %s77
      %p88 = scmp.eq.s32.totalorder %s19, 0
      %p89 = por %p87, %p88
      %p90 = scmp.ne.s32.totalorder %s76, %s77
      %p91 = scmp.eq.s32.totalorder %s20, 3
      %p92 = por %p90, %p91
      %p94 = scmp.ne.s32.totalorder %s77, %s93
      %p95 = scmp.eq.s32.totalorder %s20, 0
      %p96 = por %p94, %p95
      %s98 = sadd.s32 %s97, 1
      %p101 = scmp.eq.s32.totalorder %s14, 3
      %p102 = scmp.ne.s32.totalorder %s97, %s99
      %p103 = scmp.eq.s32.totalorder %s14, 0
      %p104 = por %p102, %p103
      %p105 = scmp.ne.s32.totalorder %s97, %s99
      %p106 = scmp.eq.s32.totalorder %s19, 3
      %p107 = por %p105, %p106
      %p108 = scmp.ne.s32.totalorder %s99, %s100
      %p109 = scmp.eq.s32.totalorder %s19, 0
      %p110 = por %p108, %p109
      %p111 = scmp.ne.s32.totalorder %s99, %s100
      %p112 = scmp.eq.s32.totalorder %s20, 3
      %p113 = por %p111, %p112
      %p115 = scmp.ne.s32.totalorder %s100, %s114
      %p116 = scmp.eq.s32.totalorder %s20, 0
      %p117 = por %p115, %p116
      %s118 = ssub.s32 %s22, %s36
      %p119 = scmp.eq.s32.totalorder %s118, 0
      %s121 = sadd.s32 %s120, 1
      %s122 = scalar_select %p119, %s120, %s121
      %p125 = pneg %p119
      %p126 = scmp.eq.s32.totalorder %s14, 3
      %p127 = por %p125, %p126
      %p128 = scmp.ne.s32.totalorder %s120, %s123
      %p129 = scmp.eq.s32.totalorder %s14, 0
      %p130 = por %p128, %p129
      %p131 = scmp.ne.s32.totalorder %s120, %s123
      %p132 = scmp.eq.s32.totalorder %s19, 3
      %p133 = por %p131, %p132
      %p134 = scmp.ne.s32.totalorder %s123, %s124
      %p135 = scmp.eq.s32.totalorder %s19, 0
      %p136 = por %p134, %p135
      %p137 = scmp.ne.s32.totalorder %s123, %s124
      %p138 = scmp.eq.s32.totalorder %s20, 3
      %p139 = por %p137, %p138
      %p141 = scmp.ne.s32.totalorder %s124, %s140
      %p142 = scmp.eq.s32.totalorder %s20, 0
      %p143 = por %p141, %p142
      %s144 = ssub.s32 %s23, %s32
      %p145 = scmp.eq.s32.totalorder %s144, 0
      %s147 = sadd.s32 %s146, 1
      %s148 = scalar_select %p145, %s146, %s147
      %p151 = pneg %p145
      %p152 = scmp.eq.s32.totalorder %s14, 3
      %p153 = por %p151, %p152
      %p154 = scmp.ne.s32.totalorder %s146, %s149
      %p155 = scmp.eq.s32.totalorder %s14, 0
      %p156 = por %p154, %p155
      %p157 = scmp.ne.s32.totalorder %s146, %s149
      %p158 = scmp.eq.s32.totalorder %s19, 3
      %p159 = por %p157, %p158
      %p160 = scmp.ne.s32.totalorder %s149, %s150
      %p161 = scmp.eq.s32.totalorder %s19, 0
      %p162 = por %p160, %p161
      %p163 = scmp.ne.s32.totalorder %s149, %s150
      %p164 = scmp.eq.s32.totalorder %s20, 3
      %p165 = por %p163, %p164
      %p167 = scmp.ne.s32.totalorder %s150, %s166
      %p168 = scmp.eq.s32.totalorder %s20, 0
      %p169 = por %p167, %p168
      %s170 = ssub.s32 %s21, %s40
      %s171 = ssub.s32 %s22, %s36
      %s172 = sor.u32 %s170, %s171
      %s173 = ssub.s32 %s23, %s32
      %s174 = sor.u32 %s172, %s173
      %p175 = scmp.eq.s32.totalorder %s174, 0
      %s177 = sadd.s32 %s176, 1
      %s178 = scalar_select %p175, %s176, %s177
      %p181 = pneg %p175
      %p182 = scmp.eq.s32.totalorder %s14, 3
      %p183 = por %p181, %p182
      %p184 = scmp.ne.s32.totalorder %s176, %s179
      %p185 = scmp.eq.s32.totalorder %s14, 0
      %p186 = por %p184, %p185
      %p187 = scmp.ne.s32.totalorder %s176, %s179
      %p188 = scmp.eq.s32.totalorder %s19, 3
      %p189 = por %p187, %p188
      %p190 = scmp.ne.s32.totalorder %s179, %s180
      %p191 = scmp.eq.s32.totalorder %s19, 0
      %p192 = por %p190, %p191
      %p193 = scmp.ne.s32.totalorder %s179, %s180
      %p194 = scmp.eq.s32.totalorder %s20, 3
      %p195 = por %p193, %p194
      %p197 = scmp.ne.s32.totalorder %s180, %s196
      %p198 = scmp.eq.s32.totalorder %s20, 0
      %p199 = por %p197, %p198
      %p200 = scmp.le.s32.totalorder 1, %s14
      %p201 = scmp.lt.s32.totalorder %s14, 5
      %p202 = pnand %p200, %p201
      %p203 = pneg %p202
      // Predicated region
      $region9: #{tpu_custom_call.1} parent=5 // pred_check
        _
      $region10: #{tpu_custom_call.1} parent=5 // pred_check_branch
        %205 = sbr.rel (%p202) target = $region12
      $region11: #{tpu_custom_call.1} parent=5 // pred_region
        %s206 = ssub.s32 %s14, 1
        // Predicated region
        $region13: #{tpu_custom_call.1} parent=11 // pred_check
          %p207 = pneg %p110
        $region14: #{tpu_custom_call.1} parent=11 // pred_check_branch
          %209 = sbr.rel (%p207) target = $region16
        $region15: #{tpu_custom_call.1} parent=11 // pred_region
          _
        $region16: #{tpu_custom_call.1} parent=11 // pred_fallthru
          _
        // Predicated region
        $region17: #{tpu_custom_call.1} parent=11 // pred_check
          %p210 = pneg %p162
        $region18: #{tpu_custom_call.1} parent=11 // pred_check_branch
          %212 = sbr.rel (%p210) target = $region20
        $region19: #{tpu_custom_call.1} parent=11 // pred_region
          %p213 = scmp.lt.s32.totalorder %s26, 0
          %s214 = scalar_select %p213, %s26, 0
          %s215 = scalar_lea.vmem %s4, %s214
        $region20: #{tpu_custom_call.1} parent=11 // pred_fallthru
          _
      $region12: #{tpu_custom_call.1} parent=5 // pred_fallthru
        _
      %p216 = scmp.lt.s32.totalorder %s14, 4
      // Predicated region
      $region21: #{tpu_custom_call.1} parent=5 // pred_check
        %p217 = pneg %p216
      $region22: #{tpu_custom_call.1} parent=5 // pred_check_branch
        %219 = sbr.rel (%p217) target = $region24
      $region23: #{tpu_custom_call.1} parent=5 // pred_region
        // Predicated region
        $region25: #{tpu_custom_call.1} parent=23 // pred_check
          %p220 = pneg %p55
        $region26: #{tpu_custom_call.1} parent=23 // pred_check_branch
          %222 = sbr.rel (%p220) target = $region28
        $region27: #{tpu_custom_call.1} parent=23 // pred_region
          %p223 = scmp.lt.s32.totalorder %s21, 1
          %s224 = scalar_select %p223, %s21, 1
          %p225 = scmp.lt.s32.totalorder %s23, 0
          %s226 = scalar_select %p225, %s23, 0
          %s227 = sadd.s32 %s226, %s224
          %s228 = scalar_lea.vmem %s0, %s227
        $region28: #{tpu_custom_call.1} parent=23 // pred_fallthru
          _
        // Predicated region
        $region29: #{tpu_custom_call.1} parent=23 // pred_check
          %p229 = pneg %p83
        $region30: #{tpu_custom_call.1} parent=23 // pred_check_branch
          %231 = sbr.rel (%p229) target = $region32
        $region31: #{tpu_custom_call.1} parent=23 // pred_region
          %p232 = scmp.lt.s32.totalorder %s21, 1
          %s233 = scalar_select %p232, %s21, 1
          %p234 = scmp.lt.s32.totalorder %s22, 1
          %s235 = scalar_select %p234, %s22, 1
          %s236 = smul.addr %s235, 25
          %s237 = smul.addr %s233, 50
          %s238 = sadd.s32 %s236, %s237
          %s239 = smul.addr %s238, 4
          %s240 = scalar_lea.vmem %s1, %s239
        $region32: #{tpu_custom_call.1} parent=23 // pred_fallthru
          _
        // Predicated region
        $region33: #{tpu_custom_call.1} parent=23 // pred_check
          %p241 = pneg %p130
        $region34: #{tpu_custom_call.1} parent=23 // pred_check_branch
          %243 = sbr.rel (%p241) target = $region36
        $region35: #{tpu_custom_call.1} parent=23 // pred_region
          %p244 = scmp.lt.s32.totalorder %s22, 1
          %s245 = scalar_select %p244, %s22, 1
          %s246 = smul.addr %s245, 18
          %s247 = smul.addr %s246, 8
          %s248 = scalar_lea.vmem %s3, %s247
        $region36: #{tpu_custom_call.1} parent=23 // pred_fallthru
          _
      $region24: #{tpu_custom_call.1} parent=5 // pred_fallthru
        _
      %p249 = scmp.le.s32.totalorder 1, %s14
      %p250 = scmp.lt.s32.totalorder %s14, 5
      %p251 = pnand %p249, %p250
      %p252 = pneg %p251
      // Predicated region
      $region37: #{tpu_custom_call.1} parent=5 // pred_check
        _
      $region38: #{tpu_custom_call.1} parent=5 // pred_check_branch
        %254 = sbr.rel (%p251) target = $region40
      $region39: #{tpu_custom_call.1} parent=5 // pred_region
        %s255 = ssub.s32 %s14, 1
        %p256 = scmp.lt.s32.totalorder %s24, 1
        %s257 = scalar_select %p256, %s24, 1
        %p258 = scmp.lt.s32.totalorder %s26, 0
        %s259 = scalar_select %p258, %s26, 0
        %s260 = sadd.s32 %s259, %s257
        %s261 = scalar_lea.vmem %s0, %s260
        %p262 = pneg %p61
        %p263 = pneg %p58
        %p264 = scmp.lt.s32.totalorder %s24, 1
        %s265 = scalar_select %p264, %s24, 1
        %p266 = scmp.lt.s32.totalorder %s25, 1
        %s267 = scalar_select %p266, %s25, 1
        %s268 = smul.addr %s267, 25
        %s269 = smul.addr %s265, 50
        %s270 = sadd.s32 %s268, %s269
        %s271 = smul.addr %s270, 4
        %s272 = scalar_lea.vmem %s1, %s271
        %p273 = pneg %p89
        %p274 = pneg %p86
        %p275 = pneg %p110
        %p276 = pneg %p107
        %p277 = scmp.lt.s32.totalorder %s25, 1
        %s278 = scalar_select %p277, %s25, 1
        %s279 = smul.addr %s278, 18
        %s280 = smul.addr %s279, 8
        %s281 = scalar_lea.vmem %s3, %s280
        %p282 = pneg %p136
        %p283 = pneg %p133
        %p284 = scmp.lt.s32.totalorder %s26, 0
        %s285 = scalar_select %p284, %s26, 0
        %s286 = scalar_lea.vmem %s4, %s285
        %p287 = pneg %p162
        %p288 = pneg %p159
        %p289 = pneg %p192
        %p290 = pneg %p189
        %s291 = sand.u32 %s179, 1
        %s292 = scalar_lea.sflag [#allocation3], %s291
        %s293 = sand.u32 %s179, 1
        %s294 = smul.addr %s293, 144
        %s295 = scalar_lea.vmem [#allocation2], %s294
        %p296 = scmp.lt.s32.totalorder %s24, 1
        %s297 = scalar_select %p296, %s24, 1
        %p298 = scmp.lt.s32.totalorder %s26, 0
        %s299 = scalar_select %p298, %s26, 0
        %s300 = sadd.s32 %s299, %s297
        %s301 = scalar_lea.vmem %s0, %s300
        %p302 = scmp.lt.s32.totalorder %s24, 1
        %s303 = scalar_select %p302, %s24, 1
        %p304 = scmp.lt.s32.totalorder %s25, 1
        %s305 = scalar_select %p304, %s25, 1
        %s306 = smul.addr %s305, 25
        %s307 = smul.addr %s303, 50
        %s308 = sadd.s32 %s306, %s307
        %s309 = smul.addr %s308, 4
        %s310 = scalar_lea.vmem %s1, %s309
        %p311 = scmp.lt.s32.totalorder %s25, 1
        %s312 = scalar_select %p311, %s25, 1
        %s313 = smul.addr %s312, 18
        %s314 = smul.addr %s313, 8
        %s315 = scalar_lea.vmem %s3, %s314
        %p316 = scmp.lt.s32.totalorder %s26, 0
        %s317 = scalar_select %p316, %s26, 0
        %s318 = scalar_lea.vmem %s4, %s317
        %v320 = vld [vmem:[%s301] sm:$0x1]
        %v321 = vld [vmem:[%s318] sm:$0x1]
        %v322 = vld [vmem:[%s310] sm:$0xf]
        %v323 = vld [vmem:[%s310 + $0x4] sm:$0xf]
        %v324 = vld [vmem:[%s310 + $0x8] sm:$0xf]
        %v325 = vld [vmem:[%s310 + $0xc] sm:$0xf]
        %v326 = vld [vmem:[%s310 + $0x10] sm:$0xf]
        %v327 = vld [vmem:[%s310 + $0x14] sm:$0xf]
        %v328 = vld [vmem:[%s310 + $0x18] sm:$0xf]
        %v329 = vld [vmem:[%s310 + $0x1c] sm:$0xf]
        %v330 = vld [vmem:[%s310 + $0x20] sm:$0xf]
        %v331 = vld [vmem:[%s310 + $0x24] sm:$0xf]
        %v332 = vld [vmem:[%s310 + $0x28] sm:$0xf]
        %v333 = vld [vmem:[%s310 + $0x2c] sm:$0xf]
        %v334 = vld [vmem:[%s310 + $0x30] sm:$0xf]
        %v335 = vld [vmem:[%s310 + $0x34] sm:$0xf]
        %v336 = vld [vmem:[%s310 + $0x38] sm:$0xf]
        %v337 = vld [vmem:[%s310 + $0x3c] sm:$0xf]
        %v338 = vld [vmem:[%s310 + $0x40] sm:$0xf]
        %v339 = vld [vmem:[%s310 + $0x44] sm:$0xf]
        %s340 = smul.u32 %s26, 3
        %s341 = smul.u32 %s340, 2
        %s342 = smul.addr %s341, 4
        %s343 = scalar_lea.vmem %s2, %s342
        %v344 = vld [vmem:[%s343] sm:$0xf]
        %v345 = vld [vmem:[%s343 + $0x4] sm:$0x3]
        %v346 = vld [vmem:[%s310 + $0x8] sm:$0xe]
        %v347 = vld [vmem:[%s310 + $0x48] sm:$0xf]
        %v348 = vld [vmem:[%s310 + $0x4c] sm:$0xf]
        %v349 = vld [vmem:[%s310 + $0x50] sm:$0x1]
        %s350 = sadd.s32 %s340, 1
        %s351 = smul.u32 %s350, 2
        %s352 = smul.addr %s351, 4
        %s353 = scalar_lea.vmem %s2, %s352
        %v354 = vld [vmem:[%s353] sm:$0xf]
        %v355 = vld [vmem:[%s353 + $0x4] sm:$0x3]
        %v375 = vunpack.c.l.b16 %v346
        %v376 = vunpack.c.l.b16 %v325
        %v377 = vunpack.c.l.b16 %v326
        %v378 = vunpack.c.l.b16 %v327
        %v379 = vunpack.c.l.b16 %v328
        %v380 = vunpack.c.l.b16 %v329
        %v381 = vunpack.c.l.b16 %v330
        %v382 = vunpack.c.l.b16 %v331
        %v383 = vunpack.c.l.b16 %v332
        %v384 = vunpack.c.l.b16 %v333
        %v385 = vunpack.c.l.b16 %v334
        %v386 = vunpack.c.l.b16 %v335
        %v387 = vunpack.c.l.b16 %v336
        %v388 = vunpack.c.l.b16 %v337
        %v389 = vunpack.c.l.b16 %v338
        %v390 = vunpack.c.l.b16 %v339
        %v391 = vunpack.c.l.b16 %v347
        %v392 = vunpack.c.l.b16 %v348
        %v393 = vunpack.c.l.b16 %v349
        %v394 = vpack.c.b16 %v376, %v375
        %v395 = vpack.c.b16 %v378, %v377
        %v396 = vpack.c.b16 %v380, %v379
        %v397 = vpack.c.b16 %v382, %v381
        %v398 = vpack.c.b16 %v384, %v383
        %v399 = vpack.c.b16 %v386, %v385
        %v400 = vpack.c.b16 %v388, %v387
        %v401 = vpack.c.b16 %v390, %v389
        %v402 = vpack.c.b16 %v392, %v391
        %v403 = vpack.c.b16 %v393, %v393
        %vm404 = vcmask 1046528
        %v405 = vrot.slane %v394, 1
        %v406 = vrot.slane %v395, 1
        %v407 = vsel %vm404, %v405, %v406
        %v408 = vrot.slane %v396, 1
        %v409 = vsel %vm404, %v406, %v408
        %v410 = vrot.slane %v397, 1
        %v411 = vsel %vm404, %v408, %v410
        %v412 = vrot.slane %v398, 1
        %v413 = vsel %vm404, %v410, %v412
        %v414 = vrot.slane %v399, 1
        %v415 = vsel %vm404, %v412, %v414
        %v416 = vrot.slane %v400, 1
        %v417 = vsel %vm404, %v414, %v416
        %v418 = vrot.slane %v401, 1
        %v419 = vsel %vm404, %v416, %v418
        %v420 = vrot.slane %v402, 1
        %v421 = vsel %vm404, %v418, %v420
        %v422 = vrot.slane %v403, 1
        %v423 = vsel %vm404, %v420, %v422
        %v426 = vunpack.c.l.b16 %v354
        %v427 = vunpack.c.l.b16 %v355
        %v428 = vpack.c.b16 %v427, %v426
        %vm429 = vcmask 97280
        %v431 = vsel %vm429, %v407, 0
        %v434 = vsel %vm429, %v409, 0
        %v437 = vsel %vm429, %v411, 0
        %v440 = vsel %vm429, %v413, 0
        %v443 = vsel %vm429, %v415, 0
        %v446 = vsel %vm429, %v417, 0
        %v449 = vsel %vm429, %v419, 0
        %v452 = vsel %vm429, %v421, 0
        %v455 = vsel %vm429, %v423, 0
        %vm457 = vcmask 1045504
        %v459 = vsel %vm457, %v428, 0
        %461 = vmatprep.subr.bf16.mxu0 0
        %462 = vmatpush1.bf16.msra.mxu0 %v459
        %463 = vmatprep.subr.bf16.mxu0 0
        %464 = vmatpush1.bf16.msra.mxu0 0
        %465 = vmatprep.subr.bf16.mxu0 0
        %466 = vmatpush1.bf16.msra.mxu0 0
        %467 = vmatprep.subr.bf16.mxu0 0
        %468 = vmatpush1.bf16.msra.mxu0 0
        %469 = vmatprep.subr.bf16.mxu0 0
        %470 = vmatpush1.bf16.msra.mxu0 0
        %471 = vmatprep.subr.bf16.mxu0 0
        %472 = vmatpush1.bf16.msra.mxu0 0
        %473 = vmatprep.subr.bf16.mxu0 0
        %474 = vmatpush1.bf16.msra.mxu0 0
        %475 = vmatprep.subr.bf16.mxu0 0
        %476 = vmatpush1.bf16.msra.mxu0 0
        %477 = vmatprep.subr.bf16.mxu0 0
        %478 = vmatpush1.bf16.msra.mxu0 0
        %479 = vmatprep.subr.bf16.mxu0 0
        %480 = vmatpush1.bf16.msra.mxu0 0
        %481 = vmatprep.subr.bf16.mxu0 0
        %482 = vmatpush1.bf16.msra.mxu0 0
        %483 = vmatprep.subr.bf16.mxu0 0
        %484 = vmatpush1.bf16.msra.mxu0 0
        %485 = vmatprep.subr.bf16.mxu0 0
        %486 = vmatpush1.bf16.msra.mxu0 0
        %487 = vmatprep.subr.bf16.mxu0 0
        %488 = vmatpush1.bf16.msra.mxu0 0
        %489 = vmatprep.subr.bf16.mxu0 0
        %490 = vmatpush1.bf16.msra.mxu0 0
        %491 = vmatprep.subr.bf16.mxu0 0
        %492 = vmatpush1.bf16.msra.mxu0 0
        %493 = vmatprep.mubr.bf16.mxu0 0
        %494 = vmatmul.mubr.bf16.gmra.mrb[0].mxu0 %v431
        %v495 = vpop.f32.mrb[0].mxu0
        %v496 = vadd.f32 0.0, %v495
        %v497 = vpop.f32.mrb[0].mxu0
        %v498 = vpop.f32.mrb[0].mxu0
        %v499 = vadd.f32 0.0, %v498
        %v500 = vpop.f32.mrb[0].mxu0
        %501 = vmatprep.mubr.bf16.mxu0 0
        %502 = vmatmul.mubr.bf16.gmra.mrb[0].mxu0 %v434
        %v503 = vpop.f32.mrb[0].mxu0
        %v504 = vadd.f32 0.0, %v503
        %v505 = vpop.f32.mrb[0].mxu0
        %v506 = vpop.f32.mrb[0].mxu0
        %v507 = vadd.f32 0.0, %v506
        %v508 = vpop.f32.mrb[0].mxu0
        %509 = vmatprep.mubr.bf16.mxu0 0
        %510 = vmatmul.mubr.bf16.gmra.mrb[0].mxu0 %v437
        %v511 = vpop.f32.mrb[0].mxu0
        %v512 = vadd.f32 0.0, %v511
        %v513 = vpop.f32.mrb[0].mxu0
        %v514 = vpop.f32.mrb[0].mxu0
        %v515 = vadd.f32 0.0, %v514
        %v516 = vpop.f32.mrb[0].mxu0
        %517 = vmatprep.mubr.bf16.mxu0 0
        %518 = vmatmul.mubr.bf16.gmra.mrb[0].mxu0 %v440
        %v519 = vpop.f32.mrb[0].mxu0
        %v520 = vadd.f32 0.0, %v519
        %v521 = vpop.f32.mrb[0].mxu0
        %v522 = vpop.f32.mrb[0].mxu0
        %v523 = vadd.f32 0.0, %v522
        %v524 = vpop.f32.mrb[0].mxu0
        %525 = vmatprep.mubr.bf16.mxu0 0
        %526 = vmatmul.mubr.bf16.gmra.mrb[0].mxu0 %v443
        %v527 = vpop.f32.mrb[0].mxu0
        %v528 = vadd.f32 0.0, %v527
        %v529 = vpop.f32.mrb[0].mxu0
        %v530 = vpop.f32.mrb[0].mxu0
        %v531 = vadd.f32 0.0, %v530
        %v532 = vpop.f32.mrb[0].mxu0
        %533 = vmatprep.mubr.bf16.mxu0 0
        %534 = vmatmul.mubr.bf16.gmra.mrb[0].mxu0 %v446
        %v535 = vpop.f32.mrb[0].mxu0
        %v536 = vadd.f32 0.0, %v535
        %v537 = vpop.f32.mrb[0].mxu0
        %v538 = vpop.f32.mrb[0].mxu0
        %v539 = vadd.f32 0.0, %v538
        %v540 = vpop.f32.mrb[0].mxu0
        %541 = vmatprep.mubr.bf16.mxu0 0
        %542 = vmatmul.mubr.bf16.gmra.mrb[0].mxu0 %v449
        %v543 = vpop.f32.mrb[0].mxu0
        %v544 = vadd.f32 0.0, %v543
        %v545 = vpop.f32.mrb[0].mxu0
        %v546 = vpop.f32.mrb[0].mxu0
        %v547 = vadd.f32 0.0, %v546
        %v548 = vpop.f32.mrb[0].mxu0
        %549 = vmatprep.mubr.bf16.mxu0 0
        %550 = vmatmul.mubr.bf16.gmra.mrb[0].mxu0 %v452
        %v551 = vpop.f32.mrb[0].mxu0
        %v552 = vadd.f32 0.0, %v551
        %v553 = vpop.f32.mrb[0].mxu0
        %v554 = vpop.f32.mrb[0].mxu0
        %v555 = vadd.f32 0.0, %v554
        %v556 = vpop.f32.mrb[0].mxu0
        %557 = vmatprep.mubr.bf16.mxu0 0
        %558 = vmatmul.mubr.bf16.gmra.mrb[0].mxu0 %v455
        %v559 = vpop.f32.mrb[0].mxu0
        %v560 = vadd.f32 0.0, %v559
        %v561 = vpop.f32.mrb[0].mxu0
        %v562 = vpop.f32.mrb[0].mxu0
        %v563 = vadd.f32 0.0, %v562
        %v564 = vpop.f32.mrb[0].mxu0
        %565 = vdwg.mxu0
        %v569 = vunpack.c.l.b16 %v322
        %v570 = vunpack.c.l.b16 %v323
        %v571 = vunpack.c.l.b16 %v324
        %v572 = vpack.c.b16 %v570, %v569
        %v573 = vpack.c.b16 %v376, %v571
        %v576 = vunpack.c.l.b16 %v344
        %v577 = vunpack.c.l.b16 %v345
        %v578 = vpack.c.b16 %v577, %v576
        %v580 = vsel %vm429, %v572, 0
        %v583 = vsel %vm429, %v573, 0
        %v586 = vsel %vm429, %v395, 0
        %v589 = vsel %vm429, %v396, 0
        %v592 = vsel %vm429, %v397, 0
        %v595 = vsel %vm429, %v398, 0
        %v598 = vsel %vm429, %v399, 0
        %v601 = vsel %vm429, %v400, 0
        %v604 = vsel %vm429, %v401, 0
        %v607 = vsel %vm457, %v578, 0
        %609 = vmatprep.subr.bf16.mxu0 0
        %610 = vmatpush1.bf16.msra.mxu0 %v607
        %611 = vmatprep.subr.bf16.mxu0 0
        %612 = vmatpush1.bf16.msra.mxu0 0
        %613 = vmatprep.subr.bf16.mxu0 0
        %614 = vmatpush1.bf16.msra.mxu0 0
        %615 = vmatprep.subr.bf16.mxu0 0
        %616 = vmatpush1.bf16.msra.mxu0 0
        %617 = vmatprep.subr.bf16.mxu0 0
        %618 = vmatpush1.bf16.msra.mxu0 0
        %619 = vmatprep.subr.bf16.mxu0 0
        %620 = vmatpush1.bf16.msra.mxu0 0
        %621 = vmatprep.subr.bf16.mxu0 0
        %622 = vmatpush1.bf16.msra.mxu0 0
        %623 = vmatprep.subr.bf16.mxu0 0
        %624 = vmatpush1.bf16.msra.mxu0 0
        %625 = vmatprep.subr.bf16.mxu0 0
        %626 = vmatpush1.bf16.msra.mxu0 0
        %627 = vmatprep.subr.bf16.mxu0 0
        %628 = vmatpush1.bf16.msra.mxu0 0
        %629 = vmatprep.subr.bf16.mxu0 0
        %630 = vmatpush1.bf16.msra.mxu0 0
        %631 = vmatprep.subr.bf16.mxu0 0
        %632 = vmatpush1.bf16.msra.mxu0 0
        %633 = vmatprep.subr.bf16.mxu0 0
        %634 = vmatpush1.bf16.msra.mxu0 0
        %635 = vmatprep.subr.bf16.mxu0 0
        %636 = vmatpush1.bf16.msra.mxu0 0
        %637 = vmatprep.subr.bf16.mxu0 0
        %638 = vmatpush1.bf16.msra.mxu0 0
        %639 = vmatprep.subr.bf16.mxu0 0
        %640 = vmatpush1.bf16.msra.mxu0 0
        %641 = vmatprep.mubr.bf16.mxu0 0
        %642 = vmatmul.mubr.bf16.gmra.mrb[0].mxu0 %v580
        %v643 = vpop.f32.mrb[0].mxu0
        %v644 = vadd.f32 %v496, %v643
        %v645 = vpop.f32.mrb[0].mxu0
        %v646 = vpop.f32.mrb[0].mxu0
        %v647 = vadd.f32 %v499, %v646
        %v648 = vpop.f32.mrb[0].mxu0
        %649 = vmatprep.mubr.bf16.mxu0 0
        %650 = vmatmul.mubr.bf16.gmra.mrb[0].mxu0 %v583
        %v651 = vpop.f32.mrb[0].mxu0
        %v652 = vadd.f32 %v504, %v651
        %v653 = vpop.f32.mrb[0].mxu0
        %v654 = vpop.f32.mrb[0].mxu0
        %v655 = vadd.f32 %v507, %v654
        %v656 = vpop.f32.mrb[0].mxu0
        %657 = vmatprep.mubr.bf16.mxu0 0
        %658 = vmatmul.mubr.bf16.gmra.mrb[0].mxu0 %v586
        %v659 = vpop.f32.mrb[0].mxu0
        %v660 = vadd.f32 %v512, %v659
        %v661 = vpop.f32.mrb[0].mxu0
        %v662 = vpop.f32.mrb[0].mxu0
        %v663 = vadd.f32 %v515, %v662
        %v664 = vpop.f32.mrb[0].mxu0
        %665 = vmatprep.mubr.bf16.mxu0 0
        %666 = vmatmul.mubr.bf16.gmra.mrb[0].mxu0 %v589
        %v667 = vpop.f32.mrb[0].mxu0
        %v668 = vadd.f32 %v520, %v667
        %v669 = vpop.f32.mrb[0].mxu0
        %v670 = vpop.f32.mrb[0].mxu0
        %v671 = vadd.f32 %v523, %v670
        %v672 = vpop.f32.mrb[0].mxu0
        %673 = vmatprep.mubr.bf16.mxu0 0
        %674 = vmatmul.mubr.bf16.gmra.mrb[0].mxu0 %v592
        %v675 = vpop.f32.mrb[0].mxu0
        %v676 = vadd.f32 %v528, %v675
        %v677 = vpop.f32.mrb[0].mxu0
        %v678 = vpop.f32.mrb[0].mxu0
        %v679 = vadd.f32 %v531, %v678
        %v680 = vpop.f32.mrb[0].mxu0
        %681 = vmatprep.mubr.bf16.mxu0 0
        %682 = vmatmul.mubr.bf16.gmra.mrb[0].mxu0 %v595
        %v683 = vpop.f32.mrb[0].mxu0
        %v684 = vadd.f32 %v536, %v683
        %v685 = vpop.f32.mrb[0].mxu0
        %v686 = vpop.f32.mrb[0].mxu0
        %v687 = vadd.f32 %v539, %v686
        %v688 = vpop.f32.mrb[0].mxu0
        %689 = vmatprep.mubr.bf16.mxu0 0
        %690 = vmatmul.mubr.bf16.gmra.mrb[0].mxu0 %v598
        %v691 = vpop.f32.mrb[0].mxu0
        %v692 = vadd.f32 %v544, %v691
        %v693 = vpop.f32.mrb[0].mxu0
        %v694 = vpop.f32.mrb[0].mxu0
        %v695 = vadd.f32 %v547, %v694
        %v696 = vpop.f32.mrb[0].mxu0
        %697 = vmatprep.mubr.bf16.mxu0 0
        %698 = vmatmul.mubr.bf16.gmra.mrb[0].mxu0 %v601
        %v699 = vpop.f32.mrb[0].mxu0
        %v700 = vadd.f32 %v552, %v699
        %v701 = vpop.f32.mrb[0].mxu0
        %v702 = vpop.f32.mrb[0].mxu0
        %v703 = vadd.f32 %v555, %v702
        %v704 = vpop.f32.mrb[0].mxu0
        %705 = vmatprep.mubr.bf16.mxu0 0
        %706 = vmatmul.mubr.bf16.gmra.mrb[0].mxu0 %v604
        %v707 = vpop.f32.mrb[0].mxu0
        %v708 = vadd.f32 %v560, %v707
        %v709 = vpop.f32.mrb[0].mxu0
        %v710 = vpop.f32.mrb[0].mxu0
        %v711 = vadd.f32 %v563, %v710
        %v712 = vpop.f32.mrb[0].mxu0
        %713 = vdwg.mxu0
        %v714 = vld [vmem:[%s310 + $0x10] sm:$0xc]
        %v715 = vld [vmem:[%s310 + $0x14] sm:$0xf]
        %v716 = vld [vmem:[%s310 + $0x18] sm:$0xf]
        %v717 = vld [vmem:[%s310 + $0x1c] sm:$0xf]
        %v718 = vld [vmem:[%s310 + $0x20] sm:$0xf]
        %v719 = vld [vmem:[%s310 + $0x24] sm:$0xf]
        %v720 = vld [vmem:[%s310 + $0x28] sm:$0xf]
        %v721 = vld [vmem:[%s310 + $0x2c] sm:$0xf]
        %v722 = vld [vmem:[%s310 + $0x30] sm:$0xf]
        %v723 = vld [vmem:[%s310 + $0x34] sm:$0xf]
        %v724 = vld [vmem:[%s310 + $0x38] sm:$0xf]
        %v725 = vld [vmem:[%s310 + $0x3c] sm:$0xf]
        %v726 = vld [vmem:[%s310 + $0x40] sm:$0xf]
        %v727 = vld [vmem:[%s310 + $0x44] sm:$0xf]
        %v728 = vld [vmem:[%s310 + $0x48] sm:$0xf]
        %v729 = vld [vmem:[%s310 + $0x4c] sm:$0xf]
        %v730 = vld [vmem:[%s310 + $0x50] sm:$0xf]
        %v731 = vld [vmem:[%s310 + $0x54] sm:$0xf]
        %v732 = vld [vmem:[%s310 + $0x58] sm:$0x3]
        %s733 = sadd.s32 %s340, 2
        %s734 = smul.u32 %s733, 2
        %s735 = smul.addr %s734, 4
        %s736 = scalar_lea.vmem %s2, %s735
        %v737 = vld [vmem:[%s736] sm:$0xf]
        %v738 = vld [vmem:[%s736 + $0x4] sm:$0x3]
        %v758 = vunpack.c.l.b16 %v714
        %v759 = vunpack.c.l.b16 %v715
        %v760 = vunpack.c.l.b16 %v716
        %v761 = vunpack.c.l.b16 %v717
        %v762 = vunpack.c.l.b16 %v718
        %v763 = vunpack.c.l.b16 %v719
        %v764 = vunpack.c.l.b16 %v720
        %v765 = vunpack.c.l.b16 %v721
        %v766 = vunpack.c.l.b16 %v722
        %v767 = vunpack.c.l.b16 %v723
        %v768 = vunpack.c.l.b16 %v724
        %v769 = vunpack.c.l.b16 %v725
        %v770 = vunpack.c.l.b16 %v726
        %v771 = vunpack.c.l.b16 %v727
        %v772 = vunpack.c.l.b16 %v728
        %v773 = vunpack.c.l.b16 %v729
        %v774 = vunpack.c.l.b16 %v730
        %v775 = vunpack.c.l.b16 %v731
        %v776 = vunpack.c.l.b16 %v732
        %v777 = vpack.c.b16 %v759, %v758
        %v778 = vpack.c.b16 %v761, %v760
        %v779 = vpack.c.b16 %v763, %v762
        %v780 = vpack.c.b16 %v765, %v764
        %v781 = vpack.c.b16 %v767, %v766
        %v782 = vpack.c.b16 %v769, %v768
        %v783 = vpack.c.b16 %v771, %v770
        %v784 = vpack.c.b16 %v773, %v772
        %v785 = vpack.c.b16 %v775, %v774
        %v786 = vpack.c.b16 %v776, %v776
        %vm787 = vcmask 1045504
        %v788 = vrot.slane %v777, 2
        %v789 = vrot.slane %v778, 2
        %v790 = vsel %vm787, %v788, %v789
        %v791 = vrot.slane %v779, 2
        %v792 = vsel %vm787, %v789, %v791
        %v793 = vrot.slane %v780, 2
        %v794 = vsel %vm787, %v791, %v793
        %v795 = vrot.slane %v781, 2
        %v796 = vsel %vm787, %v793, %v795
        %v797 = vrot.slane %v782, 2
        %v798 = vsel %vm787, %v795, %v797
        %v799 = vrot.slane %v783, 2
        %v800 = vsel %vm787, %v797, %v799
        %v801 = vrot.slane %v784, 2
        %v802 = vsel %vm787, %v799, %v801
        %v803 = vrot.slane %v785, 2
        %v804 = vsel %vm787, %v801, %v803
        %v805 = vrot.slane %v786, 2
        %v806 = vsel %vm787, %v803, %v805
        %v809 = vunpack.c.l.b16 %v737
        %v810 = vunpack.c.l.b16 %v738
        %v811 = vpack.c.b16 %v810, %v809
        %v813 = vsel %vm429, %v790, 0
        %v816 = vsel %vm429, %v792, 0
        %v819 = vsel %vm429, %v794, 0
        %v822 = vsel %vm429, %v796, 0
        %v825 = vsel %vm429, %v798, 0
        %v828 = vsel %vm429, %v800, 0
        %v831 = vsel %vm429, %v802, 0
        %v834 = vsel %vm429, %v804, 0
        %v837 = vsel %vm429, %v806, 0
        %v840 = vsel %vm457, %v811, 0
        %842 = vmatprep.subr.bf16.mxu0 0
        %843 = vmatpush1.bf16.msra.mxu0 %v840
        %844 = vmatprep.subr.bf16.mxu0 0
        %845 = vmatpush1.bf16.msra.mxu0 0
        %846 = vmatprep.subr.bf16.mxu0 0
        %847 = vmatpush1.bf16.msra.mxu0 0
        %848 = vmatprep.subr.bf16.mxu0 0
        %849 = vmatpush1.bf16.msra.mxu0 0
        %850 = vmatprep.subr.bf16.mxu0 0
        %851 = vmatpush1.bf16.msra.mxu0 0
        %852 = vmatprep.subr.bf16.mxu0 0
        %853 = vmatpush1.bf16.msra.mxu0 0
        %854 = vmatprep.subr.bf16.mxu0 0
        %855 = vmatpush1.bf16.msra.mxu0 0
        %856 = vmatprep.subr.bf16.mxu0 0
        %857 = vmatpush1.bf16.msra.mxu0 0
        %858 = vmatprep.subr.bf16.mxu0 0
        %859 = vmatpush1.bf16.msra.mxu0 0
        %860 = vmatprep.subr.bf16.mxu0 0
        %861 = vmatpush1.bf16.msra.mxu0 0
        %862 = vmatprep.subr.bf16.mxu0 0
        %863 = vmatpush1.bf16.msra.mxu0 0
        %864 = vmatprep.subr.bf16.mxu0 0
        %865 = vmatpush1.bf16.msra.mxu0 0
        %866 = vmatprep.subr.bf16.mxu0 0
        %867 = vmatpush1.bf16.msra.mxu0 0
        %868 = vmatprep.subr.bf16.mxu0 0
        %869 = vmatpush1.bf16.msra.mxu0 0
        %870 = vmatprep.subr.bf16.mxu0 0
        %871 = vmatpush1.bf16.msra.mxu0 0
        %872 = vmatprep.subr.bf16.mxu0 0
        %873 = vmatpush1.bf16.msra.mxu0 0
        %874 = vmatprep.mubr.bf16.mxu0 0
        %875 = vmatmul.mubr.bf16.gmra.mrb[0].mxu0 %v813
        %v876 = vpop.f32.mrb[0].mxu0
        %v877 = vadd.f32 0.0, %v876
        %v878 = vpop.f32.mrb[0].mxu0
        %v879 = vpop.f32.mrb[0].mxu0
        %v880 = vadd.f32 0.0, %v879
        %v881 = vpop.f32.mrb[0].mxu0
        %882 = vmatprep.mubr.bf16.mxu0 0
        %883 = vmatmul.mubr.bf16.gmra.mrb[0].mxu0 %v816
        %v884 = vpop.f32.mrb[0].mxu0
        %v885 = vadd.f32 0.0, %v884
        %v886 = vpop.f32.mrb[0].mxu0
        %v887 = vpop.f32.mrb[0].mxu0
        %v888 = vadd.f32 0.0, %v887
        %v889 = vpop.f32.mrb[0].mxu0
        %890 = vmatprep.mubr.bf16.mxu0 0
        %891 = vmatmul.mubr.bf16.gmra.mrb[0].mxu0 %v819
        %v892 = vpop.f32.mrb[0].mxu0
        %v893 = vadd.f32 0.0, %v892
        %v894 = vpop.f32.mrb[0].mxu0
        %v895 = vpop.f32.mrb[0].mxu0
        %v896 = vadd.f32 0.0, %v895
        %v897 = vpop.f32.mrb[0].mxu0
        %898 = vmatprep.mubr.bf16.mxu0 0
        %899 = vmatmul.mubr.bf16.gmra.mrb[0].mxu0 %v822
        %v900 = vpop.f32.mrb[0].mxu0
        %v901 = vadd.f32 0.0, %v900
        %v902 = vpop.f32.mrb[0].mxu0
        %v903 = vpop.f32.mrb[0].mxu0
        %v904 = vadd.f32 0.0, %v903
        %v905 = vpop.f32.mrb[0].mxu0
        %906 = vmatprep.mubr.bf16.mxu0 0
        %907 = vmatmul.mubr.bf16.gmra.mrb[0].mxu0 %v825
        %v908 = vpop.f32.mrb[0].mxu0
        %v909 = vadd.f32 0.0, %v908
        %v910 = vpop.f32.mrb[0].mxu0
        %v911 = vpop.f32.mrb[0].mxu0
        %v912 = vadd.f32 0.0, %v911
        %v913 = vpop.f32.mrb[0].mxu0
        %914 = vmatprep.mubr.bf16.mxu0 0
        %915 = vmatmul.mubr.bf16.gmra.mrb[0].mxu0 %v828
        %v916 = vpop.f32.mrb[0].mxu0
        %v917 = vadd.f32 0.0, %v916
        %v918 = vpop.f32.mrb[0].mxu0
        %v919 = vpop.f32.mrb[0].mxu0
        %v920 = vadd.f32 0.0, %v919
        %v921 = vpop.f32.mrb[0].mxu0
        %922 = vmatprep.mubr.bf16.mxu0 0
        %923 = vmatmul.mubr.bf16.gmra.mrb[0].mxu0 %v831
        %v924 = vpop.f32.mrb[0].mxu0
        %v925 = vadd.f32 0.0, %v924
        %v926 = vpop.f32.mrb[0].mxu0
        %v927 = vpop.f32.mrb[0].mxu0
        %v928 = vadd.f32 0.0, %v927
        %v929 = vpop.f32.mrb[0].mxu0
        %930 = vmatprep.mubr.bf16.mxu0 0
        %931 = vmatmul.mubr.bf16.gmra.mrb[0].mxu0 %v834
        %v932 = vpop.f32.mrb[0].mxu0
        %v933 = vadd.f32 0.0, %v932
        %v934 = vpop.f32.mrb[0].mxu0
        %v935 = vpop.f32.mrb[0].mxu0
        %v936 = vadd.f32 0.0, %v935
        %v937 = vpop.f32.mrb[0].mxu0
        %938 = vmatprep.mubr.bf16.mxu0 0
        %939 = vmatmul.mubr.bf16.gmra.mrb[0].mxu0 %v837
        %v940 = vpop.f32.mrb[0].mxu0
        %v941 = vadd.f32 0.0, %v940
        %v942 = vpop.f32.mrb[0].mxu0
        %v943 = vpop.f32.mrb[0].mxu0
        %v944 = vadd.f32 0.0, %v943
        %v945 = vpop.f32.mrb[0].mxu0
        %946 = vdwg.mxu0
        %v947 = vadd.f32 %v644, %v877
        %v948 = vadd.f32 %v647, %v880
        %v949 = vadd.f32 %v652, %v885
        %v950 = vadd.f32 %v655, %v888
        %v951 = vadd.f32 %v660, %v893
        %v952 = vadd.f32 %v663, %v896
        %v953 = vadd.f32 %v668, %v901
        %v954 = vadd.f32 %v671, %v904
        %v955 = vadd.f32 %v676, %v909
        %v956 = vadd.f32 %v679, %v912
        %v957 = vadd.f32 %v684, %v917
        %v958 = vadd.f32 %v687, %v920
        %v959 = vadd.f32 %v692, %v925
        %v960 = vadd.f32 %v695, %v928
        %v961 = vadd.f32 %v700, %v933
        %v962 = vadd.f32 %v703, %v936
        %v963 = vadd.f32 %v708, %v941
        %v964 = vadd.f32 %v711, %v944
        %v966 = vlaneseq
        %v967 = vshrl.u32 %v966, 7
        %v968 = vsub.s32 0, %v967
        %v969 = vrot.slane %v320, %v968
        %v971 = vmul.f32 %v947, %v969
        %v972 = vmul.f32 %v948, %v969
        %v973 = vmul.f32 %v949, %v969
        %v974 = vmul.f32 %v950, %v969
        %v975 = vmul.f32 %v951, %v969
        %v976 = vmul.f32 %v952, %v969
        %v977 = vmul.f32 %v953, %v969
        %v978 = vmul.f32 %v954, %v969
        %v979 = vmul.f32 %v955, %v969
        %v980 = vmul.f32 %v956, %v969
        %v981 = vmul.f32 %v957, %v969
        %v982 = vmul.f32 %v958, %v969
        %v983 = vmul.f32 %v959, %v969
        %v984 = vmul.f32 %v960, %v969
        %v985 = vmul.f32 %v961, %v969
        %v986 = vmul.f32 %v962, %v969
        %v987 = vmul.f32 %v963, %v969
        %v988 = vmul.f32 %v964, %v969
        %v989 = vld [vmem:[%s315] sm:$0xff]
        %v990 = vld [vmem:[%s315 + $0x8] sm:$0xff]
        %v991 = vld [vmem:[%s315 + $0x10] sm:$0xff]
        %v992 = vld [vmem:[%s315 + $0x18] sm:$0xff]
        %v993 = vld [vmem:[%s315 + $0x20] sm:$0xff]
        %v994 = vld [vmem:[%s315 + $0x28] sm:$0xff]
        %v995 = vld [vmem:[%s315 + $0x30] sm:$0xff]
        %v996 = vld [vmem:[%s315 + $0x38] sm:$0xff]
        %v997 = vld [vmem:[%s315 + $0x40] sm:$0xff]
        %v998 = vld [vmem:[%s315 + $0x48] sm:$0xff]
        %v999 = vld [vmem:[%s315 + $0x50] sm:$0xff]
        %v1000 = vld [vmem:[%s315 + $0x58] sm:$0xff]
        %v1001 = vld [vmem:[%s315 + $0x60] sm:$0xff]
        %v1002 = vld [vmem:[%s315 + $0x68] sm:$0xff]
        %v1003 = vld [vmem:[%s315 + $0x70] sm:$0xff]
        %v1004 = vld [vmem:[%s315 + $0x78] sm:$0xff]
        %v1005 = vld [vmem:[%s315 + $0x80] sm:$0xff]
        %v1006 = vld [vmem:[%s315 + $0x88] sm:$0xff]
        %1008 = vset.pattern.permute.xlu0 0
        %1009 = vperm.xlu0 %1008, %v989
        %v1010 = vpop.permute.xlu0 %1009
        %1013 = vset.pattern.permute.xlu0 0
        %1014 = vperm.xlu0 %1013, %v990
        %v1015 = vpop.permute.xlu0 %1014
        %1018 = vset.pattern.permute.xlu0 0
        %1019 = vperm.xlu0 %1018, %v991
        %v1020 = vpop.permute.xlu0 %1019
        %1023 = vset.pattern.permute.xlu0 0
        %1024 = vperm.xlu0 %1023, %v992
        %v1025 = vpop.permute.xlu0 %1024
        %1028 = vset.pattern.permute.xlu0 0
        %1029 = vperm.xlu0 %1028, %v993
        %v1030 = vpop.permute.xlu0 %1029
        %1033 = vset.pattern.permute.xlu0 0
        %1034 = vperm.xlu0 %1033, %v994
        %v1035 = vpop.permute.xlu0 %1034
        %1038 = vset.pattern.permute.xlu0 0
        %1039 = vperm.xlu0 %1038, %v995
        %v1040 = vpop.permute.xlu0 %1039
        %1043 = vset.pattern.permute.xlu0 0
        %1044 = vperm.xlu0 %1043, %v996
        %v1045 = vpop.permute.xlu0 %1044
        %1048 = vset.pattern.permute.xlu0 0
        %1049 = vperm.xlu0 %1048, %v997
        %v1050 = vpop.permute.xlu0 %1049
        %1053 = vset.pattern.permute.xlu0 0
        %1054 = vperm.xlu0 %1053, %v998
        %v1055 = vpop.permute.xlu0 %1054
        %1058 = vset.pattern.permute.xlu0 0
        %1059 = vperm.xlu0 %1058, %v999
        %v1060 = vpop.permute.xlu0 %1059
        %1063 = vset.pattern.permute.xlu0 0
        %1064 = vperm.xlu0 %1063, %v1000
        %v1065 = vpop.permute.xlu0 %1064
        %1068 = vset.pattern.permute.xlu0 0
        %1069 = vperm.xlu0 %1068, %v1001
        %v1070 = vpop.permute.xlu0 %1069
        %1073 = vset.pattern.permute.xlu0 0
        %1074 = vperm.xlu0 %1073, %v1002
        %v1075 = vpop.permute.xlu0 %1074
        %1078 = vset.pattern.permute.xlu0 0
        %1079 = vperm.xlu0 %1078, %v1003
        %v1080 = vpop.permute.xlu0 %1079
        %1083 = vset.pattern.permute.xlu0 0
        %1084 = vperm.xlu0 %1083, %v1004
        %v1085 = vpop.permute.xlu0 %1084
        %1088 = vset.pattern.permute.xlu0 0
        %1089 = vperm.xlu0 %1088, %v1005
        %v1090 = vpop.permute.xlu0 %1089
        %1093 = vset.pattern.permute.xlu0 0
        %1094 = vperm.xlu0 %1093, %v1006
        %v1095 = vpop.permute.xlu0 %1094
        %v1097 = vadd.f32 %v971, %v1010
        %v1098 = vadd.f32 %v972, %v1015
        %v1099 = vadd.f32 %v973, %v1020
        %v1100 = vadd.f32 %v974, %v1025
        %v1101 = vadd.f32 %v975, %v1030
        %v1102 = vadd.f32 %v976, %v1035
        %v1103 = vadd.f32 %v977, %v1040
        %v1104 = vadd.f32 %v978, %v1045
        %v1105 = vadd.f32 %v979, %v1050
        %v1106 = vadd.f32 %v980, %v1055
        %v1107 = vadd.f32 %v981, %v1060
        %v1108 = vadd.f32 %v982, %v1065
        %v1109 = vadd.f32 %v983, %v1070
        %v1110 = vadd.f32 %v984, %v1075
        %v1111 = vadd.f32 %v985, %v1080
        %v1112 = vadd.f32 %v986, %v1085
        %v1113 = vadd.f32 %v987, %v1090
        %v1114 = vadd.f32 %v988, %v1095
        %v1116 = vlaneseq
        %v1117 = vshrl.u32 %v1116, 7
        %v1118 = vsub.s32 0, %v1117
        %v1119 = vrot.slane %v321, %v1118
        %v1121 = vadd.f32 %v1097, %v1119
        %v1122 = vadd.f32 %v1098, %v1119
        %v1123 = vadd.f32 %v1099, %v1119
        %v1124 = vadd.f32 %v1100, %v1119
        %v1125 = vadd.f32 %v1101, %v1119
        %v1126 = vadd.f32 %v1102, %v1119
        %v1127 = vadd.f32 %v1103, %v1119
        %v1128 = vadd.f32 %v1104, %v1119
        %v1129 = vadd.f32 %v1105, %v1119
        %v1130 = vadd.f32 %v1106, %v1119
        %v1131 = vadd.f32 %v1107, %v1119
        %v1132 = vadd.f32 %v1108, %v1119
        %v1133 = vadd.f32 %v1109, %v1119
        %v1134 = vadd.f32 %v1110, %v1119
        %v1135 = vadd.f32 %v1111, %v1119
        %v1136 = vadd.f32 %v1112, %v1119
        %v1137 = vadd.f32 %v1113, %v1119
        %v1138 = vadd.f32 %v1114, %v1119
        %vm1139 = vcmp.ge.f32.partialorder %v1121, 0.0
        %vm1140 = vcmp.ge.f32.partialorder %v1122, 0.0
        %vm1141 = vcmp.ge.f32.partialorder %v1123, 0.0
        %vm1142 = vcmp.ge.f32.partialorder %v1124, 0.0
        %vm1143 = vcmp.ge.f32.partialorder %v1125, 0.0
        %vm1144 = vcmp.ge.f32.partialorder %v1126, 0.0
        %vm1145 = vcmp.ge.f32.partialorder %v1127, 0.0
        %vm1146 = vcmp.ge.f32.partialorder %v1128, 0.0
        %vm1147 = vcmp.ge.f32.partialorder %v1129, 0.0
        %vm1148 = vcmp.ge.f32.partialorder %v1130, 0.0
        %vm1149 = vcmp.ge.f32.partialorder %v1131, 0.0
        %vm1150 = vcmp.ge.f32.partialorder %v1132, 0.0
        %vm1151 = vcmp.ge.f32.partialorder %v1133, 0.0
        %vm1152 = vcmp.ge.f32.partialorder %v1134, 0.0
        %vm1153 = vcmp.ge.f32.partialorder %v1135, 0.0
        %vm1154 = vcmp.ge.f32.partialorder %v1136, 0.0
        %vm1155 = vcmp.ge.f32.partialorder %v1137, 0.0
        %vm1156 = vcmp.ge.f32.partialorder %v1138, 0.0
        %v1157 = vmul.f32 %v1121, 0.2
        %v1158 = vmul.f32 %v1122, 0.2
        %v1159 = vmul.f32 %v1123, 0.2
        %v1160 = vmul.f32 %v1124, 0.2
        %v1161 = vmul.f32 %v1125, 0.2
        %v1162 = vmul.f32 %v1126, 0.2
        %v1163 = vmul.f32 %v1127, 0.2
        %v1164 = vmul.f32 %v1128, 0.2
        %v1165 = vmul.f32 %v1129, 0.2
        %v1166 = vmul.f32 %v1130, 0.2
        %v1167 = vmul.f32 %v1131, 0.2
        %v1168 = vmul.f32 %v1132, 0.2
        %v1169 = vmul.f32 %v1133, 0.2
        %v1170 = vmul.f32 %v1134, 0.2
        %v1171 = vmul.f32 %v1135, 0.2
        %v1172 = vmul.f32 %v1136, 0.2
        %v1173 = vmul.f32 %v1137, 0.2
        %v1174 = vmul.f32 %v1138, 0.2
        %v1175 = vsel %vm1139, %v1121, %v1157
        %v1176 = vsel %vm1140, %v1122, %v1158
        %v1177 = vsel %vm1141, %v1123, %v1159
        %v1178 = vsel %vm1142, %v1124, %v1160
        %v1179 = vsel %vm1143, %v1125, %v1161
        %v1180 = vsel %vm1144, %v1126, %v1162
        %v1181 = vsel %vm1145, %v1127, %v1163
        %v1182 = vsel %vm1146, %v1128, %v1164
        %v1183 = vsel %vm1147, %v1129, %v1165
        %v1184 = vsel %vm1148, %v1130, %v1166
        %v1185 = vsel %vm1149, %v1131, %v1167
        %v1186 = vsel %vm1150, %v1132, %v1168
        %v1187 = vsel %vm1151, %v1133, %v1169
        %v1188 = vsel %vm1152, %v1134, %v1170
        %v1189 = vsel %vm1153, %v1135, %v1171
        %v1190 = vsel %vm1154, %v1136, %v1172
        %v1191 = vsel %vm1155, %v1137, %v1173
        %v1192 = vsel %vm1156, %v1138, %v1174
        %1193 = vst [vmem:[%s295] sm:$0xff] %v1175
        %1194 = vst [vmem:[%s295 + $0x8] sm:$0xff] %v1176
        %1195 = vst [vmem:[%s295 + $0x10] sm:$0xff] %v1177
        %1196 = vst [vmem:[%s295 + $0x18] sm:$0xff] %v1178
        %1197 = vst [vmem:[%s295 + $0x20] sm:$0xff] %v1179
        %1198 = vst [vmem:[%s295 + $0x28] sm:$0xff] %v1180
        %1199 = vst [vmem:[%s295 + $0x30] sm:$0xff] %v1181
        %1200 = vst [vmem:[%s295 + $0x38] sm:$0xff] %v1182
        %1201 = vst [vmem:[%s295 + $0x40] sm:$0xff] %v1183
        %1202 = vst [vmem:[%s295 + $0x48] sm:$0xff] %v1184
        %1203 = vst [vmem:[%s295 + $0x50] sm:$0xff] %v1185
        %1204 = vst [vmem:[%s295 + $0x58] sm:$0xff] %v1186
        %1205 = vst [vmem:[%s295 + $0x60] sm:$0xff] %v1187
        %1206 = vst [vmem:[%s295 + $0x68] sm:$0xff] %v1188
        %1207 = vst [vmem:[%s295 + $0x70] sm:$0xff] %v1189
        %1208 = vst [vmem:[%s295 + $0x78] sm:$0xff] %v1190
        %1209 = vst [vmem:[%s295 + $0x80] sm:$0xff] %v1191
        %1210 = vst [vmem:[%s295 + $0x88] sm:$0xff] %v1192
        %s1211 = sand.u32 %s179, 1
        %s1212 = scalar_lea.sflag [#allocation3], %s1211
        %s1213 = sand.u32 %s179, 1
        %s1214 = smul.addr %s1213, 144
        %s1215 = scalar_lea.vmem [#allocation2], %s1214
        // Predicated region
        $region41: #{tpu_custom_call.1} parent=39 // pred_check
          %p1216 = pneg %p189
        $region42: #{tpu_custom_call.1} parent=39 // pred_check_branch
          %1218 = sbr.rel (%p1216) target = $region44
        $region43: #{tpu_custom_call.1} parent=39 // pred_region
          %s1220 = ssub.s32 2304, 2304
          %1221 = vsyncadd %s1212, %s1220
          %s1222 = smul.addr %s25, 18
          %s1223 = sadd.s32 %s26, %s1222
          %s1224 = smul.addr %s24, 36
          %s1225 = sadd.s32 %s1223, %s1224
          %s1226 = smul.addr %s1225, 128
          %s1227 = scalar_lea.hbm %s5, %s1226
          %s1228 = sshll.u32 %s1215, 4
          %s1229 = int_to_ptr.vmem [resolvable:$true] %s1228
          %1234 = dma.vmem_to_hbm [thread:$0]  %s1229, 2304, %s1227, %s1212, 128, 128, 8
        $region44: #{tpu_custom_call.1} parent=39 // pred_fallthru
          _
      $region40: #{tpu_custom_call.1} parent=5 // pred_fallthru
        _
      %p1235 = scmp.le.s32.totalorder 2, %s14
      // Predicated region
      $region45: #{tpu_custom_call.1} parent=5 // pred_check
        %p1236 = pneg %p1235
      $region46: #{tpu_custom_call.1} parent=5 // pred_check_branch
        %1238 = sbr.rel (%p1236) target = $region48
      $region47: #{tpu_custom_call.1} parent=5 // pred_region
        %s1239 = ssub.s32 %s14, 2
        // Predicated region
        $region49: #{tpu_custom_call.1} parent=47 // pred_check
          %p1240 = pneg %p195
        $region50: #{tpu_custom_call.1} parent=47 // pred_check_branch
          %1242 = sbr.rel (%p1240) target = $region52
        $region51: #{tpu_custom_call.1} parent=47 // pred_region
          %s1243 = sand.u32 %s180, 1
          %s1244 = scalar_lea.sflag [#allocation3], %s1243
          %s1245 = sand.u32 %s180, 1
          %s1246 = smul.addr %s1245, 144
          %s1247 = scalar_lea.vmem [#allocation2], %s1246
          %1248 = dma.done %s1244, 2304
        $region52: #{tpu_custom_call.1} parent=47 // pred_fallthru
          _
      $region48: #{tpu_custom_call.1} parent=5 // pred_fallthru
        _
    $region6: #{tpu_custom_call.1} parent=1 // loop_footer
      %s18 = sadd.s32 1, %s14
    $region7: #{tpu_custom_call.1} parent=1 // loop_footer_branch
      %13 = sbr.rel target = $region3
    $region8: #{tpu_custom_call.1} parent=1 // loop_exit
      _
    %1249 = vsyncpa [#allocation3], 1
    %s1250 = scalar_lea.sflag [#allocation3], 1
    %1251 = vsyncpa %s1250, 1

</llo_original>
